<compile_context>
chip_gen: v7x
topology: tpu7x:2x2x1
jax: 0.10.0
libtpu: 0.0.40
codegen_flags: <defaults>
</compile_context>

<pallas_src>
import jax
import jax.numpy as jnp
from jax.experimental import pallas as pl
from jax.experimental.pallas import tpu as pltpu

# ---------------------------------------------------------------------------
# Same vocab construction as the PyTorch script.
# ---------------------------------------------------------------------------
raw_text = (
    'We are about to study the idea of a computational process.\n'
    'Computational processes are abstract beings that inhabit computers.\n'
    'As they evolve, processes manipulate other abstract things called data.\n'
    'The evolution of a process is directed by a pattern of rules\n'
    'called a program. People create programs to direct processes. In effect,\n'
    'we conjure the spirits of the computer with our spells.'
).split()
vocab = sorted(set(raw_text))
VOCAB_SIZE = len(vocab)
word_to_ix = {w: i for i, w in enumerate(vocab)}

EMBEDDING_DIM = 10
CONTEXT_SIZE = 2
HIDDEN = 128

K = CONTEXT_SIZE * EMBEDDING_DIM                 # 20 (raw contraction dim)
K_PAD = 32                                       # sublane-friendly contraction
V_PAD = ((VOCAB_SIZE + 127) // 128) * 128        # lane-dense vocab (49 -> 128)
TILE_B = 128   # batch rows per grid step (fills v5e MXU; fine on v6e/v7x too)
NEG_BIG = -1e30  # baked into padded b2 lanes so they never win the softmax


# ---------------------------------------------------------------------------
# Kernel: one batch tile -> relu(x @ W1 + b1) @ W2 + b2 -> log_softmax.
# Padded vocab lanes carry a -1e30 bias (zero weight columns), so they
# contribute exp(...) == 0 to the normalizer without any in-kernel masking.
# Weights live in VMEM across the whole batch grid (index_map -> (0, 0)).
# ---------------------------------------------------------------------------
def ngram_kernel(x_ref, w1_ref, b1_ref, w2_ref, b2_ref, out_ref):
    # x: (TILE_B, K_PAD) bf16 ; w1: (K_PAD, HIDDEN) bf16 ; b1: (1, HIDDEN) f32
    # w2: (HIDDEN, V_PAD) bf16 ; b2: (1, V_PAD) f32 ; out: (TILE_B, V_PAD) f32
    h = jnp.dot(x_ref[...], w1_ref[...], preferred_element_type=jnp.float32)
    h = jnp.maximum(h + b1_ref[...], 0.0)                         # ReLU (f32)
    logits = jnp.dot(h.astype(jnp.bfloat16), w2_ref[...],
                     preferred_element_type=jnp.float32) + b2_ref[...]
    m = jnp.max(logits, axis=-1, keepdims=True)
    shifted = logits - m
    lse = jnp.log(jnp.sum(jnp.exp(shifted), axis=-1, keepdims=True))
    out_ref[...] = shifted - lse


# ---------------------------------------------------------------------------
# Wrappers
# ---------------------------------------------------------------------------
def ngram_forward_batch(contexts, packed, *, tile_b=TILE_B):
    """contexts: int32 (B, CONTEXT_SIZE) -> (B, VOCAB_SIZE) log-probs."""
    emb, w1p, b1, w2p, b2p = packed
    B = contexts.shape[0]

    # TODO(synk): embedding gather could move in-kernel via
    # PrefetchScalarGridSpec scalar-prefetched indices; kept as a single XLA
    # gather here since the table is tiny (49 x 10).
    embeds = jnp.take(emb, contexts, axis=0).reshape(B, K)        # (B, 20) f32

    b_pad = pl.cdiv(B, tile_b) * tile_b
    x = jnp.pad(embeds, ((0, b_pad - B), (0, K_PAD - K))).astype(jnp.bfloat16)

    out = pl.pallas_call(
        ngram_kernel,
        out_shape=jax.ShapeDtypeStruct((b_pad, V_PAD), jnp.float32),
        grid=(b_pad // tile_b,),
        in_specs=[
            pl.BlockSpec((tile_b, K_PAD), lambda i: (i, 0)),      # per-tile x
            pl.BlockSpec((K_PAD, HIDDEN), lambda i: (0, 0)),      # resident W1
            pl.BlockSpec((1, HIDDEN), lambda i: (0, 0)),          # resident b1
            pl.BlockSpec((HIDDEN, V_PAD), lambda i: (0, 0)),      # resident W2
            pl.BlockSpec((1, V_PAD), lambda i: (0, 0)),           # resident b2
        ],
        out_specs=pl.BlockSpec((tile_b, V_PAD), lambda i: (i, 0)),
        compiler_params=pltpu.CompilerParams(
            dimension_semantics=("parallel",)),
    )(x, w1p, b1, w2p, b2p)
    return out[:B, :VOCAB_SIZE]


def ngram_forward(inputs, packed):
    """PyTorch-style forward: inputs (CONTEXT_SIZE,) int32 -> (1, VOCAB_SIZE)."""
    return ngram_forward_batch(inputs[None, :], packed)


# ---------------------------------------------------------------------------
# Params (f32 "nn.Module" params) + packing into padded/bf16 kernel layout.
# ---------------------------------------------------------------------------
def init_params(key):
    k_emb, k_w1, k_b1, k_w2, k_b2 = jax.random.split(key, 5)
    emb = jax.random.normal(k_emb, (VOCAB_SIZE, EMBEDDING_DIM), jnp.float32)
    lim1 = 1.0 / (K ** 0.5)
    w1 = jax.random.uniform(k_w1, (K, HIDDEN), jnp.float32, -lim1, lim1)
    b1 = jax.random.uniform(k_b1, (1, HIDDEN), jnp.float32, -lim1, lim1)
    lim2 = 1.0 / (HIDDEN ** 0.5)
    w2 = jax.random.uniform(k_w2, (HIDDEN, VOCAB_SIZE), jnp.float32, -lim2, lim2)
    b2 = jax.random.uniform(k_b2, (1, VOCAB_SIZE), jnp.float32, -lim2, lim2)
    return emb, w1, b1, w2, b2


def pack_params(emb, w1, b1, w2, b2):
    """Zero-pad weights to (K_PAD, HIDDEN)/(HIDDEN, V_PAD), cast matmul weights
    to bf16, and bake the padded-vocab mask into b2 (padded lanes -> -1e30)."""
    w1p = jnp.zeros((K_PAD, HIDDEN), jnp.float32).at[:K, :].set(w1)
    w2p = jnp.zeros((HIDDEN, V_PAD), jnp.float32).at[:, :VOCAB_SIZE].set(w2)
    b2p = jnp.full((1, V_PAD), NEG_BIG, jnp.float32).at[:, :VOCAB_SIZE].set(b2)
    return emb, w1p.astype(jnp.bfloat16), b1, w2p.astype(jnp.bfloat16), b2p


def ngram_reference(contexts, emb, w1, b1, w2, b2):
    """Pure-JAX f32 reference of the PyTorch forward (batched)."""
    embeds = jnp.take(emb, contexts, axis=0).reshape(contexts.shape[0], K)
    h = jnp.maximum(embeds @ w1 + b1, 0.0)
    logits = h @ w2 + b2
    return jax.nn.log_softmax(logits, axis=-1)


if __name__ == "__main__":
    key = jax.random.PRNGKey(0)
    params = init_params(key)
    packed = pack_params(*params)

    # All trigram context windows from the text (same windows the PyTorch
    # script trains on), batched into ONE pallas_call.
    contexts = jnp.array(
        [[word_to_ix[raw_text[i]], word_to_ix[raw_text[i + 1]]]
         for i in range(len(raw_text) - 2)], dtype=jnp.int32)     # (B, 2)

    fwd = jax.jit(ngram_forward_batch)
    log_probs = fwd(contexts, packed)
    jax.block_until_ready(log_probs)
    assert log_probs.shape == (contexts.shape[0], VOCAB_SIZE)

    # rows are valid log-prob distributions
    row_sums = jnp.sum(jnp.exp(log_probs), axis=-1)
    assert bool(jnp.all(jnp.abs(row_sums - 1.0) < 1e-3)), row_sums

    # matches the pure-JAX f32 reference (loose tol: bf16 matmul operands)
    ref = ngram_reference(contexts, *params)
    assert bool(jnp.max(jnp.abs(log_probs - ref)) < 5e-2)

    # PyTorch-style single-context forward still works and agrees with batch
    single = ngram_forward(contexts[0], packed)
    jax.block_until_ready(single)
    assert single.shape == (1, VOCAB_SIZE)
    assert bool(jnp.max(jnp.abs(single - log_probs[0:1])) < 1e-5)

    print("KERNEL_OK")
</pallas_src>

<mosaic_0001>
module attributes {stable_mosaic.version = 11 : i64} {
  func.func @ngram_kernel(%arg0: i32, %arg1: memref<128x32xbf16, #tpu.memory_space<vmem>>, %arg2: memref<32x128xbf16, #tpu.memory_space<vmem>>, %arg3: memref<1x128xf32, #tpu.memory_space<vmem>>, %arg4: memref<128x128xbf16, #tpu.memory_space<vmem>>, %arg5: memref<1x128xf32, #tpu.memory_space<vmem>>, %arg6: memref<128x128xf32, #tpu.memory_space<vmem>>) attributes {dimension_semantics = [#tpu.dimension_semantics<parallel>], iteration_bounds = array<i64: 1>, scalar_prefetch = 0 : i64, scratch_operands = 0 : i64, tpu.core_type = #tpu.core_type<tc>, window_params = [{transform_indices = @transform_0, window_bounds = array<i64: 128, 32>}, {pipeline_mode = #tpu.pipeline_mode<synchronous>, transform_indices = @transform_1, window_bounds = array<i64: 32, 128>}, {pipeline_mode = #tpu.pipeline_mode<synchronous>, transform_indices = @transform_2, window_bounds = array<i64: 1, 128>}, {pipeline_mode = #tpu.pipeline_mode<synchronous>, transform_indices = @transform_3, window_bounds = array<i64: 128, 128>}, {pipeline_mode = #tpu.pipeline_mode<synchronous>, transform_indices = @transform_4, window_bounds = array<i64: 1, 128>}, {transform_indices = @transform_5, window_bounds = array<i64: 128, 128>}]} {
    %c0 = arith.constant 0 : index
    %c0_0 = arith.constant 0 : index
    %0 = vector.load %arg1[%c0, %c0_0] : memref<128x32xbf16, #tpu.memory_space<vmem>>, vector<128x32xbf16>
    %c0_1 = arith.constant 0 : index
    %c0_2 = arith.constant 0 : index
    %1 = vector.load %arg2[%c0_1, %c0_2] : memref<32x128xbf16, #tpu.memory_space<vmem>>, vector<32x128xbf16>
    %cst = arith.constant dense<0.000000e+00> : vector<128x128xf32>
    %2 = tpu.matmul %0, %1, %cst {dimension_numbers = #tpu.dot_dimension_numbers<[1], [0], [0], [1], [0, 0, 1, 1], [], []>} : vector<128x32xbf16>, vector<32x128xbf16>, vector<128x128xf32> -> vector<128x128xf32>
    %c0_3 = arith.constant 0 : index
    %c0_4 = arith.constant 0 : index
    %3 = vector.load %arg3[%c0_3, %c0_4] : memref<1x128xf32, #tpu.memory_space<vmem>>, vector<1x128xf32>
    %4 = vector.broadcast %3 : vector<1x128xf32> to vector<128x128xf32>
    %5 = arith.addf %2, %4 : vector<128x128xf32>
    %cst_5 = arith.constant 0.000000e+00 : f32
    %6 = vector.broadcast %cst_5 : f32 to vector<128x128xf32>
    %7 = arith.maximumf %5, %6 : vector<128x128xf32>
    %8 = arith.truncf %7 : vector<128x128xf32> to vector<128x128xbf16>
    %c0_6 = arith.constant 0 : index
    %c0_7 = arith.constant 0 : index
    %9 = vector.load %arg4[%c0_6, %c0_7] : memref<128x128xbf16, #tpu.memory_space<vmem>>, vector<128x128xbf16>
    %cst_8 = arith.constant dense<0.000000e+00> : vector<128x128xf32>
    %10 = tpu.matmul %8, %9, %cst_8 {dimension_numbers = #tpu.dot_dimension_numbers<[1], [0], [0], [1], [0, 0, 1, 1], [], []>} : vector<128x128xbf16>, vector<128x128xbf16>, vector<128x128xf32> -> vector<128x128xf32>
    %c0_9 = arith.constant 0 : index
    %c0_10 = arith.constant 0 : index
    %11 = vector.load %arg5[%c0_9, %c0_10] : memref<1x128xf32, #tpu.memory_space<vmem>>, vector<1x128xf32>
    %12 = vector.broadcast %11 : vector<1x128xf32> to vector<128x128xf32>
    %13 = arith.addf %10, %12 : vector<128x128xf32>
    %cst_11 = arith.constant dense<0xFF800000> : vector<128xf32>
    %14 = vector.multi_reduction <maximumf>, %13, %cst_11 [1] : vector<128x128xf32> to vector<128xf32>
    %15 = vector.shape_cast %14 : vector<128xf32> to vector<128x1xf32>
    %16 = vector.broadcast %15 : vector<128x1xf32> to vector<128x128xf32>
    %17 = arith.subf %13, %16 : vector<128x128xf32>
    %18 = math.exp %17 : vector<128x128xf32>
    %cst_12 = arith.constant dense<0.000000e+00> : vector<128xf32>
    %19 = vector.multi_reduction <add>, %18, %cst_12 [1] : vector<128x128xf32> to vector<128xf32>
    %20 = vector.shape_cast %19 : vector<128xf32> to vector<128x1xf32>
    %21 = math.log %20 : vector<128x1xf32>
    %22 = vector.broadcast %21 : vector<128x1xf32> to vector<128x128xf32>
    %23 = arith.subf %17, %22 : vector<128x128xf32>
    %c0_13 = arith.constant 0 : index
    %c0_14 = arith.constant 0 : index
    %24 = vector.load %arg6[%c0_13, %c0_14] : memref<128x128xf32, #tpu.memory_space<vmem>>, vector<128x128xf32>
    tpu.vector_store %arg6[%c0_13, %c0_14], %23 {strides = array<i32>} : memref<128x128xf32, #tpu.memory_space<vmem>>, vector<128x128xf32>,
    return
  }
  func.func @transform_0(%arg0: i32) -> (i32, i32) {
    %c0_i32 = arith.constant 0 : i32
    %c0_i32_0 = arith.constant 0 : i32
    return %arg0, %c0_i32 : i32, i32
  }
  func.func @transform_1(%arg0: i32) -> (i32, i32) {
    %c0_i32 = arith.constant 0 : i32
    %c0_i32_0 = arith.constant 0 : i32
    %c0_i32_1 = arith.constant 0 : i32
    return %c0_i32, %c0_i32_0 : i32, i32
  }
  func.func @transform_2(%arg0: i32) -> (i32, i32) {
    %c0_i32 = arith.constant 0 : i32
    %c0_i32_0 = arith.constant 0 : i32
    %c0_i32_1 = arith.constant 0 : i32
    return %c0_i32, %c0_i32_0 : i32, i32
  }
  func.func @transform_3(%arg0: i32) -> (i32, i32) {
    %c0_i32 = arith.constant 0 : i32
    %c0_i32_0 = arith.constant 0 : i32
    %c0_i32_1 = arith.constant 0 : i32
    return %c0_i32, %c0_i32_0 : i32, i32
  }
  func.func @transform_4(%arg0: i32) -> (i32, i32) {
    %c0_i32 = arith.constant 0 : i32
    %c0_i32_0 = arith.constant 0 : i32
    %c0_i32_1 = arith.constant 0 : i32
    return %c0_i32, %c0_i32_0 : i32, i32
  }
  func.func @transform_5(%arg0: i32) -> (i32, i32) {
    %c0_i32 = arith.constant 0 : i32
    %c0_i32_0 = arith.constant 0 : i32
    return %arg0, %c0_i32 : i32, i32
  }
}

</mosaic_0001>

<llo_original>
// kernel: ngram_forward_batch.1
$region0: #{ngram_forward_batch.1}
  #allocation0 [shape = 'u32[]', space=smem, size = 0x4, offset = 0x4, fixed_abs, tag = 'smem constant byte address 0x4 - core index']
  #allocation1 [shape = 'u32[144,128]{1,0:T(1,128)}', space=vmem, size = 0x12000, scoped, tag = 'internal scratch']
  %s0 = inlined_call_operand.vmem [shape: bf16[128,32], index: 0, kind: input, shape index: {}]
  %s1 = inlined_call_operand.vmem [shape: bf16[32,128], index: 1, kind: input, shape index: {}]
  %s2 = inlined_call_operand.vmem [shape: f32[1,128], index: 2, kind: input, shape index: {}]
  %s3 = inlined_call_operand.vmem [shape: bf16[128,128], index: 3, kind: input, shape index: {}]
  %s4 = inlined_call_operand.vmem [shape: f32[1,128], index: 4, kind: input, shape index: {}]
  %s5 = inlined_call_operand.vmem [shape: f32[128,128], index: 5, kind: output, shape index: {}]
  %s6 = sld [smem:[#allocation0]]
  $region30: #{ngram_forward_batch.1} parent=0
    _
  %s8 = ssub.s32 1, %s6
  %s9 = scalar_select 0, %s8, %s6
  // Predicated region
  $region2: #{ngram_forward_batch.1} parent=0 // pred_check
    _
  $region3: #{ngram_forward_batch.1} parent=0 // pred_check_branch
    %11 = sbr.rel (0) target = $region5
  $region4: #{ngram_forward_batch.1} parent=0 // pred_region
    _
  $region5: #{ngram_forward_batch.1} parent=0 // pred_fallthru
    _
  // Predicated region
  $region6: #{ngram_forward_batch.1} parent=0 // pred_check
    _
  $region7: #{ngram_forward_batch.1} parent=0 // pred_check_branch
    %13 = sbr.rel (0) target = $region9
  $region8: #{ngram_forward_batch.1} parent=0 // pred_region
    _
  $region9: #{ngram_forward_batch.1} parent=0 // pred_fallthru
    _
  // Predicated region
  $region10: #{ngram_forward_batch.1} parent=0 // pred_check
    _
  $region11: #{ngram_forward_batch.1} parent=0 // pred_check_branch
    %15 = sbr.rel (0) target = $region13
  $region12: #{ngram_forward_batch.1} parent=0 // pred_region
    _
  $region13: #{ngram_forward_batch.1} parent=0 // pred_fallthru
    _
  // Predicated region
  $region14: #{ngram_forward_batch.1} parent=0 // pred_check
    _
  $region15: #{ngram_forward_batch.1} parent=0 // pred_check_branch
    %17 = sbr.rel (0) target = $region17
  $region16: #{ngram_forward_batch.1} parent=0 // pred_region
    _
  $region17: #{ngram_forward_batch.1} parent=0 // pred_fallthru
    _
  // Predicated region
  $region18: #{ngram_forward_batch.1} parent=0 // pred_check
    _
  $region19: #{ngram_forward_batch.1} parent=0 // pred_check_branch
    %19 = sbr.rel (0) target = $region21
  $region20: #{ngram_forward_batch.1} parent=0 // pred_region
    _
  $region21: #{ngram_forward_batch.1} parent=0 // pred_fallthru
    _
  %v21 = vld [vmem:[%s0] sm:$0xf]
  %v22 = vld [vmem:[%s0 + $0x4] sm:$0xf]
  %v23 = vld [vmem:[%s0 + $0x8] sm:$0xf]
  %v24 = vld [vmem:[%s0 + $0xc] sm:$0xf]
  %v25 = vld [vmem:[%s0 + $0x10] sm:$0xf]
  %v26 = vld [vmem:[%s0 + $0x14] sm:$0xf]
  %v27 = vld [vmem:[%s0 + $0x18] sm:$0xf]
  %v28 = vld [vmem:[%s0 + $0x1c] sm:$0xf]
  %v29 = vld [vmem:[%s0 + $0x20] sm:$0xf]
  %v30 = vld [vmem:[%s0 + $0x24] sm:$0xf]
  %v31 = vld [vmem:[%s0 + $0x28] sm:$0xf]
  %v32 = vld [vmem:[%s0 + $0x2c] sm:$0xf]
  %v33 = vld [vmem:[%s0 + $0x30] sm:$0xf]
  %v34 = vld [vmem:[%s0 + $0x34] sm:$0xf]
  %v35 = vld [vmem:[%s0 + $0x38] sm:$0xf]
  %v36 = vld [vmem:[%s0 + $0x3c] sm:$0xf]
  %v37 = vld [vmem:[%s1] sm:$0xf]
  %v38 = vld [vmem:[%s1 + $0x4] sm:$0xf]
  %v39 = vld [vmem:[%s1 + $0x8] sm:$0xf]
  %v40 = vld [vmem:[%s1 + $0xc] sm:$0xf]
  %v41 = vld [vmem:[%s2] sm:$0x1]
  %v43 = vlaneseq
  %v44 = vshrl.u32 %v43, 7
  %v45 = vsub.s32 0, %v44
  %v46 = vrot.slane %v41, %v45
  %v64 = vunpack.c.l.b16 %v21
  %v65 = vunpack.c.l.b16 %v22
  %v66 = vunpack.c.l.b16 %v23
  %v67 = vunpack.c.l.b16 %v24
  %v68 = vunpack.c.l.b16 %v25
  %v69 = vunpack.c.l.b16 %v26
  %v70 = vunpack.c.l.b16 %v27
  %v71 = vunpack.c.l.b16 %v28
  %v72 = vunpack.c.l.b16 %v29
  %v73 = vunpack.c.l.b16 %v30
  %v74 = vunpack.c.l.b16 %v31
  %v75 = vunpack.c.l.b16 %v32
  %v76 = vunpack.c.l.b16 %v33
  %v77 = vunpack.c.l.b16 %v34
  %v78 = vunpack.c.l.b16 %v35
  %v79 = vunpack.c.l.b16 %v36
  %v80 = vpack.c.b16 %v65, %v64
  %v81 = vpack.c.b16 %v67, %v66
  %v82 = vpack.c.b16 %v69, %v68
  %v83 = vpack.c.b16 %v71, %v70
  %v84 = vpack.c.b16 %v73, %v72
  %v85 = vpack.c.b16 %v75, %v74
  %v86 = vpack.c.b16 %v77, %v76
  %v87 = vpack.c.b16 %v79, %v78
  %v92 = vunpack.c.l.b16 %v37
  %v93 = vunpack.c.l.b16 %v38
  %v94 = vunpack.c.l.b16 %v39
  %v95 = vunpack.c.l.b16 %v40
  %v96 = vpack.c.b16 %v93, %v92
  %v97 = vpack.c.b16 %v95, %v94
  %vm100 = vcmask 261120
  %v102 = vsel %vm100, %v80, 0
  %v105 = vsel %vm100, %v81, 0
  %v108 = vsel %vm100, %v82, 0
  %v111 = vsel %vm100, %v83, 0
  %v114 = vsel %vm100, %v84, 0
  %v117 = vsel %vm100, %v85, 0
  %v120 = vsel %vm100, %v86, 0
  %v123 = vsel %vm100, %v87, 0
  %125 = vmatprep.subr.bf16.mxu0 0
  %126 = vmatpush1.bf16.msra.mxu0 %v96
  %127 = vmatprep.subr.bf16.mxu0 0
  %128 = vmatpush1.bf16.msra.mxu0 %v97
  %129 = vmatprep.subr.bf16.mxu0 0
  %130 = vmatpush1.bf16.msra.mxu0 0
  %131 = vmatprep.subr.bf16.mxu0 0
  %132 = vmatpush1.bf16.msra.mxu0 0
  %133 = vmatprep.subr.bf16.mxu0 0
  %134 = vmatpush1.bf16.msra.mxu0 0
  %135 = vmatprep.subr.bf16.mxu0 0
  %136 = vmatpush1.bf16.msra.mxu0 0
  %137 = vmatprep.subr.bf16.mxu0 0
  %138 = vmatpush1.bf16.msra.mxu0 0
  %139 = vmatprep.subr.bf16.mxu0 0
  %140 = vmatpush1.bf16.msra.mxu0 0
  %141 = vmatprep.subr.bf16.mxu0 0
  %142 = vmatpush1.bf16.msra.mxu0 0
  %143 = vmatprep.subr.bf16.mxu0 0
  %144 = vmatpush1.bf16.msra.mxu0 0
  %145 = vmatprep.subr.bf16.mxu0 0
  %146 = vmatpush1.bf16.msra.mxu0 0
  %147 = vmatprep.subr.bf16.mxu0 0
  %148 = vmatpush1.bf16.msra.mxu0 0
  %149 = vmatprep.subr.bf16.mxu0 0
  %150 = vmatpush1.bf16.msra.mxu0 0
  %151 = vmatprep.subr.bf16.mxu0 0
  %152 = vmatpush1.bf16.msra.mxu0 0
  %153 = vmatprep.subr.bf16.mxu0 0
  %154 = vmatpush1.bf16.msra.mxu0 0
  %155 = vmatprep.subr.bf16.mxu0 0
  %156 = vmatpush1.bf16.msra.mxu0 0
  %157 = vmatprep.mubr.bf16.mxu0 0
  %158 = vmatmul.mubr.bf16.gmra.mrb[0].mxu0 %v102
  %v159 = vpop.f32.mrb[0].mxu0
  %v160 = vadd.f32 %v46, %v159
  %v161 = vpop.f32.mrb[0].mxu0
  %v162 = vpop.f32.mrb[0].mxu0
  %v163 = vadd.f32 %v46, %v162
  %v164 = vpop.f32.mrb[0].mxu0
  %165 = vmatprep.mubr.bf16.mxu0 0
  %166 = vmatmul.mubr.bf16.gmra.mrb[0].mxu0 %v105
  %v167 = vpop.f32.mrb[0].mxu0
  %v168 = vadd.f32 %v46, %v167
  %v169 = vpop.f32.mrb[0].mxu0
  %v170 = vpop.f32.mrb[0].mxu0
  %v171 = vadd.f32 %v46, %v170
  %v172 = vpop.f32.mrb[0].mxu0
  %173 = vmatprep.mubr.bf16.mxu0 0
  %174 = vmatmul.mubr.bf16.gmra.mrb[0].mxu0 %v108
  %v175 = vpop.f32.mrb[0].mxu0
  %v176 = vadd.f32 %v46, %v175
  %v177 = vpop.f32.mrb[0].mxu0
  %v178 = vpop.f32.mrb[0].mxu0
  %v179 = vadd.f32 %v46, %v178
  %v180 = vpop.f32.mrb[0].mxu0
  %181 = vmatprep.mubr.bf16.mxu0 0
  %182 = vmatmul.mubr.bf16.gmra.mrb[0].mxu0 %v111
  %v183 = vpop.f32.mrb[0].mxu0
  %v184 = vadd.f32 %v46, %v183
  %v185 = vpop.f32.mrb[0].mxu0
  %v186 = vpop.f32.mrb[0].mxu0
  %v187 = vadd.f32 %v46, %v186
  %v188 = vpop.f32.mrb[0].mxu0
  %189 = vmatprep.mubr.bf16.mxu0 0
  %190 = vmatmul.mubr.bf16.gmra.mrb[0].mxu0 %v114
  %v191 = vpop.f32.mrb[0].mxu0
  %v192 = vadd.f32 %v46, %v191
  %v193 = vpop.f32.mrb[0].mxu0
  %v194 = vpop.f32.mrb[0].mxu0
  %v195 = vadd.f32 %v46, %v194
  %v196 = vpop.f32.mrb[0].mxu0
  %197 = vmatprep.mubr.bf16.mxu0 0
  %198 = vmatmul.mubr.bf16.gmra.mrb[0].mxu0 %v117
  %v199 = vpop.f32.mrb[0].mxu0
  %v200 = vadd.f32 %v46, %v199
  %v201 = vpop.f32.mrb[0].mxu0
  %v202 = vpop.f32.mrb[0].mxu0
  %v203 = vadd.f32 %v46, %v202
  %v204 = vpop.f32.mrb[0].mxu0
  %205 = vmatprep.mubr.bf16.mxu0 0
  %206 = vmatmul.mubr.bf16.gmra.mrb[0].mxu0 %v120
  %v207 = vpop.f32.mrb[0].mxu0
  %v208 = vadd.f32 %v46, %v207
  %v209 = vpop.f32.mrb[0].mxu0
  %v210 = vpop.f32.mrb[0].mxu0
  %v211 = vadd.f32 %v46, %v210
  %v212 = vpop.f32.mrb[0].mxu0
  %213 = vmatprep.mubr.bf16.mxu0 0
  %214 = vmatmul.mubr.bf16.gmra.mrb[0].mxu0 %v123
  %v215 = vpop.f32.mrb[0].mxu0
  %v216 = vadd.f32 %v46, %v215
  %v217 = vpop.f32.mrb[0].mxu0
  %v218 = vpop.f32.mrb[0].mxu0
  %v219 = vadd.f32 %v46, %v218
  %v220 = vpop.f32.mrb[0].mxu0
  %221 = vdwg.mxu0
  %v222 = vmax.f32 %v160, 0.0
  %v223 = vmax.f32 %v163, 0.0
  %v224 = vmax.f32 %v168, 0.0
  %v225 = vmax.f32 %v171, 0.0
  %v226 = vmax.f32 %v176, 0.0
  %v227 = vmax.f32 %v179, 0.0
  %v228 = vmax.f32 %v184, 0.0
  %v229 = vmax.f32 %v187, 0.0
  %v230 = vmax.f32 %v192, 0.0
  %v231 = vmax.f32 %v195, 0.0
  %v232 = vmax.f32 %v200, 0.0
  %v233 = vmax.f32 %v203, 0.0
  %v234 = vmax.f32 %v208, 0.0
  %v235 = vmax.f32 %v211, 0.0
  %v236 = vmax.f32 %v216, 0.0
  %v237 = vmax.f32 %v219, 0.0
  %v238 = vpack.c.bf16 %v223, %v222
  %v239 = vpack.c.bf16 %v225, %v224
  %v240 = vpack.c.bf16 %v227, %v226
  %v241 = vpack.c.bf16 %v229, %v228
  %v242 = vpack.c.bf16 %v231, %v230
  %v243 = vpack.c.bf16 %v233, %v232
  %v244 = vpack.c.bf16 %v235, %v234
  %v245 = vpack.c.bf16 %v237, %v236
  %v246 = vld [vmem:[%s3] sm:$0xf]
  %v247 = vld [vmem:[%s3 + $0x4] sm:$0xf]
  %v248 = vld [vmem:[%s3 + $0x8] sm:$0xf]
  %v249 = vld [vmem:[%s3 + $0xc] sm:$0xf]
  %v250 = vld [vmem:[%s3 + $0x10] sm:$0xf]
  %v251 = vld [vmem:[%s3 + $0x14] sm:$0xf]
  %v252 = vld [vmem:[%s3 + $0x18] sm:$0xf]
  %v253 = vld [vmem:[%s3 + $0x1c] sm:$0xf]
  %v254 = vld [vmem:[%s3 + $0x20] sm:$0xf]
  %v255 = vld [vmem:[%s3 + $0x24] sm:$0xf]
  %v256 = vld [vmem:[%s3 + $0x28] sm:$0xf]
  %v257 = vld [vmem:[%s3 + $0x2c] sm:$0xf]
  %v258 = vld [vmem:[%s3 + $0x30] sm:$0xf]
  %v259 = vld [vmem:[%s3 + $0x34] sm:$0xf]
  %v260 = vld [vmem:[%s3 + $0x38] sm:$0xf]
  %v261 = vld [vmem:[%s3 + $0x3c] sm:$0xf]
  %v262 = vld [vmem:[%s4] sm:$0x1]
  %v264 = vlaneseq
  %v265 = vshrl.u32 %v264, 7
  %v266 = vsub.s32 0, %v265
  %v267 = vrot.slane %v262, %v266
  %v285 = vunpack.c.l.b16 %v246
  %v286 = vunpack.c.l.b16 %v247
  %v287 = vunpack.c.l.b16 %v248
  %v288 = vunpack.c.l.b16 %v249
  %v289 = vunpack.c.l.b16 %v250
  %v290 = vunpack.c.l.b16 %v251
  %v291 = vunpack.c.l.b16 %v252
  %v292 = vunpack.c.l.b16 %v253
  %v293 = vunpack.c.l.b16 %v254
  %v294 = vunpack.c.l.b16 %v255
  %v295 = vunpack.c.l.b16 %v256
  %v296 = vunpack.c.l.b16 %v257
  %v297 = vunpack.c.l.b16 %v258
  %v298 = vunpack.c.l.b16 %v259
  %v299 = vunpack.c.l.b16 %v260
  %v300 = vunpack.c.l.b16 %v261
  %v301 = vpack.c.b16 %v286, %v285
  %v302 = vpack.c.b16 %v288, %v287
  %v303 = vpack.c.b16 %v290, %v289
  %v304 = vpack.c.b16 %v292, %v291
  %v305 = vpack.c.b16 %v294, %v293
  %v306 = vpack.c.b16 %v296, %v295
  %v307 = vpack.c.b16 %v298, %v297
  %v308 = vpack.c.b16 %v300, %v299
  %317 = vmatprep.subr.bf16.mxu0 0
  %318 = vmatpush1.bf16.msra.mxu0 %v301
  %319 = vmatprep.subr.bf16.mxu0 0
  %320 = vmatpush1.bf16.msra.mxu0 %v302
  %321 = vmatprep.subr.bf16.mxu0 0
  %322 = vmatpush1.bf16.msra.mxu0 %v303
  %323 = vmatprep.subr.bf16.mxu0 0
  %324 = vmatpush1.bf16.msra.mxu0 %v304
  %325 = vmatprep.subr.bf16.mxu0 0
  %326 = vmatpush1.bf16.msra.mxu0 %v305
  %327 = vmatprep.subr.bf16.mxu0 0
  %328 = vmatpush1.bf16.msra.mxu0 %v306
  %329 = vmatprep.subr.bf16.mxu0 0
  %330 = vmatpush1.bf16.msra.mxu0 %v307
  %331 = vmatprep.subr.bf16.mxu0 0
  %332 = vmatpush1.bf16.msra.mxu0 %v308
  %333 = vmatprep.subr.bf16.mxu0 0
  %334 = vmatpush1.bf16.msra.mxu0 0
  %335 = vmatprep.subr.bf16.mxu0 0
  %336 = vmatpush1.bf16.msra.mxu0 0
  %337 = vmatprep.subr.bf16.mxu0 0
  %338 = vmatpush1.bf16.msra.mxu0 0
  %339 = vmatprep.subr.bf16.mxu0 0
  %340 = vmatpush1.bf16.msra.mxu0 0
  %341 = vmatprep.subr.bf16.mxu0 0
  %342 = vmatpush1.bf16.msra.mxu0 0
  %343 = vmatprep.subr.bf16.mxu0 0
  %344 = vmatpush1.bf16.msra.mxu0 0
  %345 = vmatprep.subr.bf16.mxu0 0
  %346 = vmatpush1.bf16.msra.mxu0 0
  %347 = vmatprep.subr.bf16.mxu0 0
  %348 = vmatpush1.bf16.msra.mxu0 0
  %349 = vmatprep.mubr.bf16.mxu0 0
  %350 = vmatmul.mubr.bf16.gmra.mrb[0].mxu0 %v238
  %v351 = vpop.f32.mrb[0].mxu0
  %v352 = vadd.f32 %v267, %v351
  %v353 = vpop.f32.mrb[0].mxu0
  %v354 = vpop.f32.mrb[0].mxu0
  %v355 = vadd.f32 %v267, %v354
  %v356 = vpop.f32.mrb[0].mxu0
  %357 = vmatprep.mubr.bf16.mxu0 0
  %358 = vmatmul.mubr.bf16.gmra.mrb[0].mxu0 %v239
  %v359 = vpop.f32.mrb[0].mxu0
  %v360 = vadd.f32 %v267, %v359
  %v361 = vpop.f32.mrb[0].mxu0
  %v362 = vpop.f32.mrb[0].mxu0
  %v363 = vadd.f32 %v267, %v362
  %v364 = vpop.f32.mrb[0].mxu0
  %365 = vmatprep.mubr.bf16.mxu0 0
  %366 = vmatmul.mubr.bf16.gmra.mrb[0].mxu0 %v240
  %v367 = vpop.f32.mrb[0].mxu0
  %v368 = vadd.f32 %v267, %v367
  %v369 = vpop.f32.mrb[0].mxu0
  %v370 = vpop.f32.mrb[0].mxu0
  %v371 = vadd.f32 %v267, %v370
  %v372 = vpop.f32.mrb[0].mxu0
  %373 = vmatprep.mubr.bf16.mxu0 0
  %374 = vmatmul.mubr.bf16.gmra.mrb[0].mxu0 %v241
  %v375 = vpop.f32.mrb[0].mxu0
  %v376 = vadd.f32 %v267, %v375
  %v377 = vpop.f32.mrb[0].mxu0
  %v378 = vpop.f32.mrb[0].mxu0
  %v379 = vadd.f32 %v267, %v378
  %v380 = vpop.f32.mrb[0].mxu0
  %381 = vmatprep.mubr.bf16.mxu0 0
  %382 = vmatmul.mubr.bf16.gmra.mrb[0].mxu0 %v242
  %v383 = vpop.f32.mrb[0].mxu0
  %v384 = vadd.f32 %v267, %v383
  %v385 = vpop.f32.mrb[0].mxu0
  %v386 = vpop.f32.mrb[0].mxu0
  %v387 = vadd.f32 %v267, %v386
  %v388 = vpop.f32.mrb[0].mxu0
  %389 = vmatprep.mubr.bf16.mxu0 0
  %390 = vmatmul.mubr.bf16.gmra.mrb[0].mxu0 %v243
  %v391 = vpop.f32.mrb[0].mxu0
  %v392 = vadd.f32 %v267, %v391
  %v393 = vpop.f32.mrb[0].mxu0
  %v394 = vpop.f32.mrb[0].mxu0
  %v395 = vadd.f32 %v267, %v394
  %v396 = vpop.f32.mrb[0].mxu0
  %397 = vmatprep.mubr.bf16.mxu0 0
  %398 = vmatmul.mubr.bf16.gmra.mrb[0].mxu0 %v244
  %v399 = vpop.f32.mrb[0].mxu0
  %v400 = vadd.f32 %v267, %v399
  %v401 = vpop.f32.mrb[0].mxu0
  %v402 = vpop.f32.mrb[0].mxu0
  %v403 = vadd.f32 %v267, %v402
  %v404 = vpop.f32.mrb[0].mxu0
  %405 = vmatprep.mubr.bf16.mxu0 0
  %406 = vmatmul.mubr.bf16.gmra.mrb[0].mxu0 %v245
  %v407 = vpop.f32.mrb[0].mxu0
  %v408 = vadd.f32 %v267, %v407
  %v409 = vpop.f32.mrb[0].mxu0
  %v410 = vpop.f32.mrb[0].mxu0
  %v411 = vadd.f32 %v267, %v410
  %v412 = vpop.f32.mrb[0].mxu0
  %413 = vdwg.mxu0
  %414 = vmax.xlane.f32.xlu0 %v352
  %v415 = vpop.xlane.xlu0 %414
  %416 = vmax.xlane.f32.xlu0 %v355
  %v417 = vpop.xlane.xlu0 %416
  %418 = vmax.xlane.f32.xlu0 %v360
  %v419 = vpop.xlane.xlu0 %418
  %420 = vmax.xlane.f32.xlu0 %v363
  %v421 = vpop.xlane.xlu0 %420
  %422 = vmax.xlane.f32.xlu0 %v368
  %v423 = vpop.xlane.xlu0 %422
  %424 = vmax.xlane.f32.xlu0 %v371
  %v425 = vpop.xlane.xlu0 %424
  %426 = vmax.xlane.f32.xlu0 %v376
  %v427 = vpop.xlane.xlu0 %426
  %428 = vmax.xlane.f32.xlu0 %v379
  %v429 = vpop.xlane.xlu0 %428
  %430 = vmax.xlane.f32.xlu0 %v384
  %v431 = vpop.xlane.xlu0 %430
  %432 = vmax.xlane.f32.xlu0 %v387
  %v433 = vpop.xlane.xlu0 %432
  %434 = vmax.xlane.f32.xlu0 %v392
  %v435 = vpop.xlane.xlu0 %434
  %436 = vmax.xlane.f32.xlu0 %v395
  %v437 = vpop.xlane.xlu0 %436
  %438 = vmax.xlane.f32.xlu0 %v400
  %v439 = vpop.xlane.xlu0 %438
  %440 = vmax.xlane.f32.xlu0 %v403
  %v441 = vpop.xlane.xlu0 %440
  %442 = vmax.xlane.f32.xlu0 %v408
  %v443 = vpop.xlane.xlu0 %442
  %444 = vmax.xlane.f32.xlu0 %v411
  %v445 = vpop.xlane.xlu0 %444
  %v446 = vsub.f32 %v352, %v415
  %v447 = vsub.f32 %v355, %v417
  %v448 = vsub.f32 %v360, %v419
  %v449 = vsub.f32 %v363, %v421
  %v450 = vsub.f32 %v368, %v423
  %v451 = vsub.f32 %v371, %v425
  %v452 = vsub.f32 %v376, %v427
  %v453 = vsub.f32 %v379, %v429
  %v454 = vsub.f32 %v384, %v431
  %v455 = vsub.f32 %v387, %v433
  %v456 = vsub.f32 %v392, %v435
  %v457 = vsub.f32 %v395, %v437
  %v458 = vsub.f32 %v400, %v439
  %v459 = vsub.f32 %v403, %v441
  %v460 = vsub.f32 %v408, %v443
  %v461 = vsub.f32 %v411, %v445
  %v462 = vmul.f32 %v446, 1.442695
  %v463 = vpow.pop %v462
  %v464 = vmul.f32 %v447, 1.442695
  %v465 = vpow.pop %v464
  %v466 = vmul.f32 %v448, 1.442695
  %v467 = vpow.pop %v466
  %v468 = vmul.f32 %v449, 1.442695
  %v469 = vpow.pop %v468
  %v470 = vmul.f32 %v450, 1.442695
  %v471 = vpow.pop %v470
  %v472 = vmul.f32 %v451, 1.442695
  %v473 = vpow.pop %v472
  %v474 = vmul.f32 %v452, 1.442695
  %v475 = vpow.pop %v474
  %v476 = vmul.f32 %v453, 1.442695
  %v477 = vpow.pop %v476
  %v478 = vmul.f32 %v454, 1.442695
  %v479 = vpow.pop %v478
  %v480 = vmul.f32 %v455, 1.442695
  %v481 = vpow.pop %v480
  %v482 = vmul.f32 %v456, 1.442695
  %v483 = vpow.pop %v482
  %v484 = vmul.f32 %v457, 1.442695
  %v485 = vpow.pop %v484
  %v486 = vmul.f32 %v458, 1.442695
  %v487 = vpow.pop %v486
  %v488 = vmul.f32 %v459, 1.442695
  %v489 = vpow.pop %v488
  %v490 = vmul.f32 %v460, 1.442695
  %v491 = vpow.pop %v490
  %v492 = vmul.f32 %v461, 1.442695
  %v493 = vpow.pop %v492
  %494 = vadd.xlane.f32.xlu0 %v463
  %v495 = vpop.xlane.xlu0 %494
  %496 = vadd.xlane.f32.xlu0 %v465
  %v497 = vpop.xlane.xlu0 %496
  %498 = vadd.xlane.f32.xlu0 %v467
  %v499 = vpop.xlane.xlu0 %498
  %500 = vadd.xlane.f32.xlu0 %v469
  %v501 = vpop.xlane.xlu0 %500
  %502 = vadd.xlane.f32.xlu0 %v471
  %v503 = vpop.xlane.xlu0 %502
  %504 = vadd.xlane.f32.xlu0 %v473
  %v505 = vpop.xlane.xlu0 %504
  %506 = vadd.xlane.f32.xlu0 %v475
  %v507 = vpop.xlane.xlu0 %506
  %508 = vadd.xlane.f32.xlu0 %v477
  %v509 = vpop.xlane.xlu0 %508
  %510 = vadd.xlane.f32.xlu0 %v479
  %v511 = vpop.xlane.xlu0 %510
  %512 = vadd.xlane.f32.xlu0 %v481
  %v513 = vpop.xlane.xlu0 %512
  %514 = vadd.xlane.f32.xlu0 %v483
  %v515 = vpop.xlane.xlu0 %514
  %516 = vadd.xlane.f32.xlu0 %v485
  %v517 = vpop.xlane.xlu0 %516
  %518 = vadd.xlane.f32.xlu0 %v487
  %v519 = vpop.xlane.xlu0 %518
  %520 = vadd.xlane.f32.xlu0 %v489
  %v521 = vpop.xlane.xlu0 %520
  %522 = vadd.xlane.f32.xlu0 %v491
  %v523 = vpop.xlane.xlu0 %522
  %524 = vadd.xlane.f32.xlu0 %v493
  %v525 = vpop.xlane.xlu0 %524
  %v526 = vlog2.pop %v495
  %v527 = vmul.f32 %v526, 0.6931472
  %v528 = vlog2.pop %v497
  %v529 = vmul.f32 %v528, 0.6931472
  %v530 = vlog2.pop %v499
  %v531 = vmul.f32 %v530, 0.6931472
  %v532 = vlog2.pop %v501
  %v533 = vmul.f32 %v532, 0.6931472
  %v534 = vlog2.pop %v503
  %v535 = vmul.f32 %v534, 0.6931472
  %v536 = vlog2.pop %v505
  %v537 = vmul.f32 %v536, 0.6931472
  %v538 = vlog2.pop %v507
  %v539 = vmul.f32 %v538, 0.6931472
  %v540 = vlog2.pop %v509
  %v541 = vmul.f32 %v540, 0.6931472
  %v542 = vlog2.pop %v511
  %v543 = vmul.f32 %v542, 0.6931472
  %v544 = vlog2.pop %v513
  %v545 = vmul.f32 %v544, 0.6931472
  %v546 = vlog2.pop %v515
  %v547 = vmul.f32 %v546, 0.6931472
  %v548 = vlog2.pop %v517
  %v549 = vmul.f32 %v548, 0.6931472
  %v550 = vlog2.pop %v519
  %v551 = vmul.f32 %v550, 0.6931472
  %v552 = vlog2.pop %v521
  %v553 = vmul.f32 %v552, 0.6931472
  %v554 = vlog2.pop %v523
  %v555 = vmul.f32 %v554, 0.6931472
  %v556 = vlog2.pop %v525
  %v557 = vmul.f32 %v556, 0.6931472
  %v558 = vsub.f32 %v446, %v527
  %v559 = vsub.f32 %v447, %v529
  %v560 = vsub.f32 %v448, %v531
  %v561 = vsub.f32 %v449, %v533
  %v562 = vsub.f32 %v450, %v535
  %v563 = vsub.f32 %v451, %v537
  %v564 = vsub.f32 %v452, %v539
  %v565 = vsub.f32 %v453, %v541
  %v566 = vsub.f32 %v454, %v543
  %v567 = vsub.f32 %v455, %v545
  %v568 = vsub.f32 %v456, %v547
  %v569 = vsub.f32 %v457, %v549
  %v570 = vsub.f32 %v458, %v551
  %v571 = vsub.f32 %v459, %v553
  %v572 = vsub.f32 %v460, %v555
  %v573 = vsub.f32 %v461, %v557
  %574 = vst [vmem:[%s5] sm:$0xff] %v558
  %575 = vst [vmem:[%s5 + $0x8] sm:$0xff] %v559
  %576 = vst [vmem:[%s5 + $0x10] sm:$0xff] %v560
  %577 = vst [vmem:[%s5 + $0x18] sm:$0xff] %v561
  %578 = vst [vmem:[%s5 + $0x20] sm:$0xff] %v562
  %579 = vst [vmem:[%s5 + $0x28] sm:$0xff] %v563
  %580 = vst [vmem:[%s5 + $0x30] sm:$0xff] %v564
  %581 = vst [vmem:[%s5 + $0x38] sm:$0xff] %v565
  %582 = vst [vmem:[%s5 + $0x40] sm:$0xff] %v566
  %583 = vst [vmem:[%s5 + $0x48] sm:$0xff] %v567
  %584 = vst [vmem:[%s5 + $0x50] sm:$0xff] %v568
  %585 = vst [vmem:[%s5 + $0x58] sm:$0xff] %v569
  %586 = vst [vmem:[%s5 + $0x60] sm:$0xff] %v570
  %587 = vst [vmem:[%s5 + $0x68] sm:$0xff] %v571
  %588 = vst [vmem:[%s5 + $0x70] sm:$0xff] %v572
  %589 = vst [vmem:[%s5 + $0x78] sm:$0xff] %v573
  // Predicated region
  $region22: #{ngram_forward_batch.1} parent=0 // pred_check
    _
  $region23: #{ngram_forward_batch.1} parent=0 // pred_check_branch
    %591 = sbr.rel (0) target = $region25
  $region24: #{ngram_forward_batch.1} parent=0 // pred_region
    _
  $region25: #{ngram_forward_batch.1} parent=0 // pred_fallthru
    _
  // Predicated region
  $region26: #{ngram_forward_batch.1} parent=0 // pred_check
    _
  $region27: #{ngram_forward_batch.1} parent=0 // pred_check_branch
    %593 = sbr.rel (0) target = $region29
  $region28: #{ngram_forward_batch.1} parent=0 // pred_region
    _
  $region29: #{ngram_forward_batch.1} parent=0 // pred_fallthru
    _

</llo_original>
